<compile_context>
chip_gen: v7x
topology: tpu7x:2x2x1
jax: 0.10.0
libtpu: 0.0.40
codegen_flags: <defaults>
</compile_context>

<pallas_src>
import jax
import jax.numpy as jnp
from jax.experimental import pallas as pl
from jax.experimental.pallas import tpu as pltpu


def _round_up(a, b):
    return (a + b - 1) // b * b


# --------------------------------------------------------------------------
# Kernels
# --------------------------------------------------------------------------

def _fcblock_single_kernel(alpha_ref, x_ref, w_ref, shift_ref, o_ref):
    """Whole problem in one invocation (no grid)."""
    y = jnp.dot(x_ref[...], w_ref[...], preferred_element_type=jnp.float32)
    y = y + shift_ref[...]
    a = alpha_ref[0]
    o_ref[...] = jnp.where(y > 0, y, a * y).astype(o_ref.dtype)


def _fcblock_grid_kernel_f32out(alpha_ref, x_ref, w_ref, shift_ref, o_ref):
    """3-D grid kernel, accumulates directly into the (resident) f32 output."""
    k = pl.program_id(2)

    @pl.when(k == 0)
    def _init():
        o_ref[...] = jnp.zeros_like(o_ref)

    o_ref[...] += jnp.dot(x_ref[...], w_ref[...],
                          preferred_element_type=jnp.float32)

    @pl.when(k == pl.num_programs(2) - 1)
    def _finalize():
        y = o_ref[...] + shift_ref[...]
        a = alpha_ref[0]
        o_ref[...] = jnp.where(y > 0, y, a * y)


def _fcblock_grid_kernel_acc(alpha_ref, x_ref, w_ref, shift_ref, o_ref, acc_ref):
    """3-D grid kernel with f32 VMEM accumulator (for non-f32 outputs)."""
    k = pl.program_id(2)

    @pl.when(k == 0)
    def _init():
        acc_ref[...] = jnp.zeros_like(acc_ref)

    acc_ref[...] += jnp.dot(x_ref[...], w_ref[...],
                            preferred_element_type=jnp.float32)

    @pl.when(k == pl.num_programs(2) - 1)
    def _finalize():
        y = acc_ref[...] + shift_ref[...]
        a = alpha_ref[0]
        o_ref[...] = jnp.where(y > 0, y, a * y).astype(o_ref.dtype)


# --------------------------------------------------------------------------
# Host-side parameter preparation (done once per model, reused every forward)
# --------------------------------------------------------------------------

def fcblock_prepare(w, bias, gamma, beta, running_mean, running_var, alpha, *,
                    eps=1e-5, compute_dtype=jnp.bfloat16,
                    tile_n_max=256, tile_k_max=512):
    """Fold eval-mode BN + Linear bias into a padded weight and one shift.

    w: (Cout, Cin) = nn.Linear.weight; bias/gamma/beta/mean/var: (Cout,);
    alpha: scalar PReLU slope. Returns a params dict consumed by fcblock_apply.
    """
    Cout, Cin = w.shape

    inv_std = jax.lax.rsqrt(running_var.astype(jnp.float32) + eps)
    scale = gamma.astype(jnp.float32) * inv_std                          # (Cout,)
    bn_shift = beta.astype(jnp.float32) - running_mean.astype(jnp.float32) * scale
    w_folded = w.astype(jnp.float32).T * scale[None, :]                  # (Cin, Cout)
    shift_folded = bias.astype(jnp.float32) * scale + bn_shift           # (Cout,)

    # ---- feature-dim padding / tile selection (batch-independent) ----
    cout_pad = _round_up(Cout, 128)
    # Pad Cout up to a 256 multiple if the waste is modest (better MXU N use).
    if cout_pad % 256 != 0 and (_round_up(Cout, 256) - Cout) <= max(64, Cout // 4):
        cout_pad = _round_up(Cout, 256)
    tile_n = 128
    for cand in (512, 256):
        if cand <= tile_n_max and cout_pad % cand == 0:
            tile_n = cand
            break

    # Always pad K to a multiple of 128 (full MXU contraction depth / lanes).
    cin_pad = _round_up(Cin, 128)
    if cin_pad <= tile_k_max:
        tile_k = cin_pad
    else:
        tile_k = 128
        for cand in (512, 256):
            if cand <= tile_k_max and cin_pad % cand == 0:
                tile_k = cand
                break

    w_p = jnp.zeros((cin_pad, cout_pad), compute_dtype)
    w_p = w_p.at[:Cin, :Cout].set(w_folded.astype(compute_dtype))
    shift_p = jnp.zeros((1, cout_pad), jnp.float32)
    shift_p = shift_p.at[0, :Cout].set(shift_folded)
    alpha1d = jnp.asarray(alpha, jnp.float32).reshape(1)

    return {
        "Cin": Cin, "Cout": Cout,
        "cin_pad": cin_pad, "cout_pad": cout_pad,
        "tile_k": tile_k, "tile_n": tile_n,
        "compute_dtype": jnp.dtype(compute_dtype),
        "w_p": w_p, "shift_p": shift_p, "alpha": alpha1d,
    }


# --------------------------------------------------------------------------
# Forward
# --------------------------------------------------------------------------

def fcblock_apply(params, x, *, out_dtype=None, tile_m_max=512):
    """Eval-mode FCBlock forward. x: (N, Cin) -> (N, Cout)."""
    N, Cin = x.shape
    assert Cin == params["Cin"], "input feature dim mismatch"
    Cout = params["Cout"]
    compute_dtype = params["compute_dtype"]
    cin_pad, cout_pad = params["cin_pad"], params["cout_pad"]
    tile_k, tile_n = params["tile_k"], params["tile_n"]
    out_dtype = jnp.dtype(out_dtype or x.dtype)

    # Balanced M split, aligned to the packed-sublane height of compute_dtype.
    m_align = 16 if jnp.dtype(compute_dtype).itemsize < 4 else 8
    num_m = max(1, -(-N // tile_m_max))                 # ceil(N / tile_m_max)
    tile_m = _round_up(-(-N // num_m), m_align)         # balanced, aligned tile
    m_pad = tile_m * num_m

    x_cast = x.astype(compute_dtype)
    if (m_pad, cin_pad) != (N, Cin):
        x_p = jnp.zeros((m_pad, cin_pad), compute_dtype).at[:N, :Cin].set(x_cast)
    else:
        x_p = x_cast

    in_b = jnp.dtype(compute_dtype).itemsize
    out_b = out_dtype.itemsize
    total_bytes = (m_pad * cin_pad + cin_pad * cout_pad) * in_b \
        + m_pad * cout_pad * out_b + cout_pad * 4

    if total_bytes <= 4 * 1024 * 1024:
        # ---- single-block fast path: no grid, no reduction loop, no pl.when ----
        out_p = pl.pallas_call(
            _fcblock_single_kernel,
            out_shape=jax.ShapeDtypeStruct((m_pad, cout_pad), out_dtype),
            in_specs=[
                pl.BlockSpec(memory_space=pltpu.SMEM),                   # alpha
                pl.BlockSpec(memory_space=pltpu.MemorySpace.VMEM),       # x
                pl.BlockSpec(memory_space=pltpu.MemorySpace.VMEM),       # weight
                pl.BlockSpec(memory_space=pltpu.MemorySpace.VMEM),       # shift
            ],
            out_specs=pl.BlockSpec(memory_space=pltpu.MemorySpace.VMEM),
        )(params["alpha"], x_p, params["w_p"], params["shift_p"])
    else:
        # ---- 3-D grid path: M x Cout parallel, K ("arbitrary") reduction ----
        grid = (m_pad // tile_m, cout_pad // tile_n, cin_pad // tile_k)
        use_f32_out = out_dtype == jnp.dtype(jnp.float32)

        vmem_est = (2 * tile_m * tile_k * in_b
                    + 2 * tile_k * tile_n * in_b
                    + 2 * tile_m * tile_n * out_b
                    + (0 if use_f32_out else tile_m * tile_n * 4)
                    + 2 * tile_n * 4)
        vmem_limit = None
        # Trigger at 12 MiB (v5e scoped default is 16 MiB); cap at 48 MiB so
        # Mosaic scratch still has headroom on v7x's 64 MiB physical VMEM.
        if vmem_est > 12 * 1024 * 1024:
            vmem_limit = min(int(vmem_est * 3 // 2), 48 * 1024 * 1024)

        kernel = _fcblock_grid_kernel_f32out if use_f32_out else _fcblock_grid_kernel_acc
        scratch = [] if use_f32_out else [pltpu.VMEM((tile_m, tile_n), jnp.float32)]

        out_p = pl.pallas_call(
            kernel,
            out_shape=jax.ShapeDtypeStruct((m_pad, cout_pad), out_dtype),
            grid=grid,
            in_specs=[
                pl.BlockSpec(memory_space=pltpu.SMEM),                        # alpha
                pl.BlockSpec((tile_m, tile_k), lambda i, j, k: (i, k)),       # x tile
                pl.BlockSpec((tile_k, tile_n), lambda i, j, k: (k, j)),       # weight tile
                pl.BlockSpec((1, tile_n), lambda i, j, k: (0, j)),            # shift
            ],
            out_specs=pl.BlockSpec((tile_m, tile_n), lambda i, j, k: (i, j)),
            scratch_shapes=scratch,
            compiler_params=pltpu.CompilerParams(
                dimension_semantics=("parallel", "parallel", "arbitrary"),
                vmem_limit_bytes=vmem_limit),
        )(params["alpha"], x_p, params["w_p"], params["shift_p"])

    if (m_pad, cout_pad) != (N, Cout):
        return out_p[:N, :Cout]
    return out_p


def fcblock_forward(x, w, bias, gamma, beta, running_mean, running_var, alpha,
                    *, eps=1e-5, compute_dtype=jnp.bfloat16, out_dtype=None,
                    tile_m_max=512, tile_n_max=256, tile_k_max=512):
    """One-shot convenience wrapper (prefer prepare+apply to cache folding)."""
    params = fcblock_prepare(w, bias, gamma, beta, running_mean, running_var,
                             alpha, eps=eps, compute_dtype=compute_dtype,
                             tile_n_max=tile_n_max, tile_k_max=tile_k_max)
    return fcblock_apply(params, x, out_dtype=out_dtype, tile_m_max=tile_m_max)


def fcblock_reference(x, w, bias, gamma, beta, running_mean, running_var,
                      alpha, eps=1e-5):
    y = x @ w.T + bias
    y = (y - running_mean) / jnp.sqrt(running_var + eps) * gamma + beta
    # dropout: identity in eval mode
    return jnp.where(y > 0, y, alpha * y)


# --------------------------------------------------------------------------
# Demo / checks
# --------------------------------------------------------------------------

def _make_params(key, cin, cout):
    kw, kb, kg, kbeta, km, kv = jax.random.split(key, 6)
    w = jax.random.normal(kw, (cout, cin), jnp.float32) * 0.1       # Linear.weight
    bias = jax.random.normal(kb, (cout,), jnp.float32) * 0.1        # Linear.bias
    gamma = 1.0 + 0.1 * jax.random.normal(kg, (cout,), jnp.float32) # bn.weight
    beta = 0.1 * jax.random.normal(kbeta, (cout,), jnp.float32)     # bn.bias
    mean = 0.1 * jax.random.normal(km, (cout,), jnp.float32)
    var = jnp.abs(1.0 + 0.1 * jax.random.normal(kv, (cout,), jnp.float32))
    return w, bias, gamma, beta, mean, var


if __name__ == "__main__":
    key = jax.random.PRNGKey(0)
    k1, k2, k3, k4 = jax.random.split(key, 4)
    alpha = jnp.float32(0.25)                                        # PReLU default

    # ---- Small demo (batch=16, Cin=32, Cout=64): single-block fast path ----
    in_ch, out_ch, batch = 32, 64, 16
    x = jax.random.normal(k1, (batch, in_ch), jnp.float32)
    w, bias, gamma, beta, mean, var = _make_params(k2, in_ch, out_ch)
    ref = fcblock_reference(x, w, bias, gamma, beta, mean, var, alpha)

    # f32 MXU-input path (tight check).
    p_f32 = fcblock_prepare(w, bias, gamma, beta, mean, var, alpha,
                            compute_dtype=jnp.float32)
    out_f32 = jax.block_until_ready(fcblock_apply(p_f32, x))
    assert out_f32.shape == (batch, out_ch)
    assert jnp.allclose(out_f32, ref, atol=1e-4, rtol=1e-4), "f32 mismatch"

    # bf16 MXU-input path (default; f32 accumulation) — params folded ONCE,
    # reused across calls.
    p_bf16 = fcblock_prepare(w, bias, gamma, beta, mean, var, alpha)
    out_bf16 = jax.block_until_ready(fcblock_apply(p_bf16, x))
    assert jnp.allclose(out_bf16.astype(jnp.float32), ref,
                        atol=5e-2, rtol=5e-2), "bf16 mismatch (fast path)"

    # ---- Larger ragged shapes: exercises the 3-D grid / K-reduction path ----
    in2, out2, n2 = 1024, 768, 1030
    x2 = jax.random.normal(k3, (n2, in2), jnp.float32)
    w2, bias2, gamma2, beta2, mean2, var2 = _make_params(k4, in2, out2)
    ref2 = fcblock_reference(x2, w2, bias2, gamma2, beta2, mean2, var2, alpha)

    p2 = fcblock_prepare(w2, bias2, gamma2, beta2, mean2, var2, alpha)  # bf16 default
    # f32 output -> in-place accumulation grid kernel (no scratch).
    out2_f32 = jax.block_until_ready(fcblock_apply(p2, x2))
    assert out2_f32.shape == (n2, out2)
    assert jnp.allclose(out2_f32, ref2, atol=3e-1, rtol=1e-1), \
        "bf16 grid-path (f32 out) mismatch"
    # bf16 output -> accumulator-scratch grid kernel.
    out2_bf16 = jax.block_until_ready(
        fcblock_apply(p2, x2, out_dtype=jnp.bfloat16))
    assert jnp.allclose(out2_bf16.astype(jnp.float32), ref2,
                        atol=3e-1, rtol=1e-1), "bf16 grid-path (bf16 out) mismatch"

    # TODO(synk): training-mode BatchNorm (batch statistics + running-stat
    # update) and stochastic dropout are not implemented; this reproduces the
    # eval-mode forward only.
    print("KERNEL_OK")
</pallas_src>

<mosaic_0001>
module attributes {stable_mosaic.version = 11 : i64} {
  func.func @_fcblock_single_kernel(%arg0: memref<1xf32, #tpu.memory_space<smem>>, %arg1: memref<16x128xf32, #tpu.memory_space<vmem>>, %arg2: memref<128x128xf32, #tpu.memory_space<vmem>>, %arg3: memref<1x128xf32, #tpu.memory_space<vmem>>, %arg4: memref<16x128xf32, #tpu.memory_space<vmem>>) attributes {dimension_semantics = [], scalar_prefetch = 0 : i64, scratch_operands = 0 : i64, tpu.core_type = #tpu.core_type<tc>} {
    %c0 = arith.constant 0 : index
    %c0_0 = arith.constant 0 : index
    %0 = vector.load %arg1[%c0, %c0_0] : memref<16x128xf32, #tpu.memory_space<vmem>>, vector<16x128xf32>
    %c0_1 = arith.constant 0 : index
    %c0_2 = arith.constant 0 : index
    %1 = vector.load %arg2[%c0_1, %c0_2] : memref<128x128xf32, #tpu.memory_space<vmem>>, vector<128x128xf32>
    %cst = arith.constant dense<0.000000e+00> : vector<16x128xf32>
    %2 = tpu.matmul %0, %1, %cst {dimension_numbers = #tpu.dot_dimension_numbers<[1], [0], [0], [1], [0, 0, 1, 1], [], []>} : vector<16x128xf32>, vector<128x128xf32>, vector<16x128xf32> -> vector<16x128xf32>
    %c0_3 = arith.constant 0 : index
    %c0_4 = arith.constant 0 : index
    %3 = vector.load %arg3[%c0_3, %c0_4] : memref<1x128xf32, #tpu.memory_space<vmem>>, vector<1x128xf32>
    %4 = vector.broadcast %3 : vector<1x128xf32> to vector<16x128xf32>
    %5 = arith.addf %2, %4 : vector<16x128xf32>
    %c0_5 = arith.constant 0 : index
    %6 = memref.load %arg0[%c0_5] : memref<1xf32, #tpu.memory_space<smem>>
    %cst_6 = arith.constant 0.000000e+00 : f32
    %7 = vector.broadcast %cst_6 : f32 to vector<16x128xf32>
    %8 = arith.cmpf ogt, %5, %7 : vector<16x128xf32>
    %9 = vector.broadcast %6 : f32 to vector<16x128xf32>
    %10 = arith.mulf %9, %5 : vector<16x128xf32>
    %11 = arith.select %8, %5, %10 : vector<16x128xi1>, vector<16x128xf32>
    %c0_7 = arith.constant 0 : index
    %c0_8 = arith.constant 0 : index
    %12 = vector.load %arg4[%c0_7, %c0_8] : memref<16x128xf32, #tpu.memory_space<vmem>>, vector<16x128xf32>
    tpu.vector_store %arg4[%c0_7, %c0_8], %11 {strides = array<i32>} : memref<16x128xf32, #tpu.memory_space<vmem>>, vector<16x128xf32>,
    return
  }
}

</mosaic_0001>

<llo_original>
// kernel: tpu_custom_call.1
$region0: #{tpu_custom_call.1}
  #allocation0 [shape = 'u32[]', space=smem, size = 0x4, offset = 0x4, fixed_abs, tag = 'smem constant byte address 0x4 - core index']
  #allocation1 [shape = 'u32[144,128]{1,0:T(1,128)}', space=vmem, size = 0x12000, scoped, tag = 'internal scratch']
  #allocation2 [shape = 'f32[1]{0:T(128)S(6)}', space=smem, size = 0x200, scoped, tag = 'scoped memory for tpu_custom_call.1']
  %s0 = inlined_call_operand.<no memory space> [shape: f32[1], index: 0, kind: input, shape index: {}]
  %s1 = inlined_call_operand.hbm [shape: f32[16,128], index: 1, kind: input, shape index: {}]
  %s2 = inlined_call_operand.hbm [shape: f32[128,128], index: 2, kind: input, shape index: {}]
  %s3 = inlined_call_operand.vmem [shape: f32[1,128], index: 3, kind: input, shape index: {}]
  %s4 = inlined_call_operand.hbm [shape: f32[16,128], index: 4, kind: output, shape index: {}]
  %s5 = sld [smem:[#allocation0]]
  $region34: #{tpu_custom_call.1} parent=0
    _
  %s7 = ssub.s32 1, %s5
  %s8 = scalar_select 0, %s7, %s5
  %9 = sst [smem:[#allocation2]] %s0
  $region1: #{tpu_custom_call.1} parent=0
    #allocation3 [shape = 'u8[8192]{0}', space=vmem, size = 0x2000, scoped, tag = 'input window, operand 1, single buffered']
    #allocation4 [shape = 's32[1]{0}', space=sflag, size = 0x4, scoped, tag = 'scoped memory for tpu_custom_call.1']
    #allocation5 [shape = 's32[1]{0}', space=sflag, size = 0x4, scoped, tag = 'scoped memory for tpu_custom_call.1']
    #allocation6 [shape = 'u8[65536]{0}', space=vmem, size = 0x10000, scoped, tag = 'input window, operand 2, single buffered']
    #allocation7 [shape = 's32[1]{0}', space=sflag, size = 0x4, scoped, tag = 'scoped memory for tpu_custom_call.1']
    #allocation8 [shape = 'u8[8192]{0}', space=vmem, size = 0x2000, scoped, tag = 'output window, operand 0, single buffered']
    %10 = vsyncpa [#allocation4], 0
    %11 = vsyncpa [#allocation7], 0
    %12 = vsyncpa [#allocation5], 0
    // Predicated region
    $region2: #{tpu_custom_call.1} parent=1 // pred_check
      _
    $region3: #{tpu_custom_call.1} parent=1 // pred_check_branch
      %14 = sbr.rel (0) target = $region5
    $region4: #{tpu_custom_call.1} parent=1 // pred_region
      _
    $region5: #{tpu_custom_call.1} parent=1 // pred_fallthru
      _
    // Predicated region
    $region6: #{tpu_custom_call.1} parent=1 // pred_check
      _
    $region7: #{tpu_custom_call.1} parent=1 // pred_check_branch
      %16 = sbr.rel (0) target = $region9
    $region8: #{tpu_custom_call.1} parent=1 // pred_region
      %s18 = ssub.s32 256, 256
      %19 = vsyncadd [#allocation4], %s18
      %s20 = sshll.u32 [#allocation3], 4
      %s21 = int_to_ptr.vmem [resolvable:$true] %s20
      %26 = dma.hbm_to_vmem [thread:$0]  %s1, 256, %s21, [#allocation4], 128, 128, 8
    $region9: #{tpu_custom_call.1} parent=1 // pred_fallthru
      _
    // Predicated region
    $region10: #{tpu_custom_call.1} parent=1 // pred_check
      _
    $region11: #{tpu_custom_call.1} parent=1 // pred_check_branch
      %28 = sbr.rel (0) target = $region13
    $region12: #{tpu_custom_call.1} parent=1 // pred_region
      %s30 = ssub.s32 2048, 2048
      %31 = vsyncadd [#allocation7], %s30
      %s32 = sshll.u32 [#allocation6], 4
      %s33 = int_to_ptr.vmem [resolvable:$true] %s32
      %38 = dma.hbm_to_vmem [thread:$0]  %s2, 2048, %s33, [#allocation7], 128, 128, 8
    $region13: #{tpu_custom_call.1} parent=1 // pred_fallthru
      _
    // Predicated region
    $region14: #{tpu_custom_call.1} parent=1 // pred_check
      _
    $region15: #{tpu_custom_call.1} parent=1 // pred_check_branch
      %40 = sbr.rel (0) target = $region17
    $region16: #{tpu_custom_call.1} parent=1 // pred_region
      _
    $region17: #{tpu_custom_call.1} parent=1 // pred_fallthru
      _
    // Predicated region
    $region18: #{tpu_custom_call.1} parent=1 // pred_check
      _
    $region19: #{tpu_custom_call.1} parent=1 // pred_check_branch
      %42 = sbr.rel (0) target = $region21
    $region20: #{tpu_custom_call.1} parent=1 // pred_region
      %43 = dma.done [#allocation4], 256
    $region21: #{tpu_custom_call.1} parent=1 // pred_fallthru
      _
    // Predicated region
    $region22: #{tpu_custom_call.1} parent=1 // pred_check
      _
    $region23: #{tpu_custom_call.1} parent=1 // pred_check_branch
      %45 = sbr.rel (0) target = $region25
    $region24: #{tpu_custom_call.1} parent=1 // pred_region
      %46 = dma.done [#allocation7], 2048
    $region25: #{tpu_custom_call.1} parent=1 // pred_fallthru
      _
    %v47 = vld [vmem:[#allocation3] sm:$0xff]
    %v48 = vld [vmem:[#allocation3 + $0x8] sm:$0xff]
    %v49 = vld [vmem:[#allocation6] sm:$0xff]
    %v50 = vld [vmem:[#allocation6 + $0x8] sm:$0xff]
    %v51 = vld [vmem:[#allocation6 + $0x10] sm:$0xff]
    %v52 = vld [vmem:[#allocation6 + $0x18] sm:$0xff]
    %v53 = vld [vmem:[#allocation6 + $0x20] sm:$0xff]
    %v54 = vld [vmem:[#allocation6 + $0x28] sm:$0xff]
    %v55 = vld [vmem:[#allocation6 + $0x30] sm:$0xff]
    %v56 = vld [vmem:[#allocation6 + $0x38] sm:$0xff]
    %v57 = vld [vmem:[#allocation6 + $0x40] sm:$0xff]
    %v58 = vld [vmem:[#allocation6 + $0x48] sm:$0xff]
    %v59 = vld [vmem:[#allocation6 + $0x50] sm:$0xff]
    %v60 = vld [vmem:[#allocation6 + $0x58] sm:$0xff]
    %v61 = vld [vmem:[#allocation6 + $0x60] sm:$0xff]
    %v62 = vld [vmem:[#allocation6 + $0x68] sm:$0xff]
    %v63 = vld [vmem:[#allocation6 + $0x70] sm:$0xff]
    %v64 = vld [vmem:[#allocation6 + $0x78] sm:$0xff]
    %v65 = vld [vmem:[%s3] sm:$0x1]
    %v67 = vlaneseq
    %v68 = vshrl.u32 %v67, 7
    %v69 = vsub.s32 0, %v68
    %v70 = vrot.slane %v65, %v69
    %72 = vmatprep.subr.mxu0 0.0
    %73 = vmatpush1.msra.mxu0 %v49
    %74 = vmatprep.subr.mxu0 0.0
    %75 = vmatpush1.msra.mxu0 %v50
    %76 = vmatprep.subr.mxu0 0.0
    %77 = vmatpush1.msra.mxu0 %v51
    %78 = vmatprep.subr.mxu0 0.0
    %79 = vmatpush1.msra.mxu0 %v52
    %80 = vmatprep.subr.mxu0 0.0
    %81 = vmatpush1.msra.mxu0 %v53
    %82 = vmatprep.subr.mxu0 0.0
    %83 = vmatpush1.msra.mxu0 %v54
    %84 = vmatprep.subr.mxu0 0.0
    %85 = vmatpush1.msra.mxu0 %v55
    %86 = vmatprep.subr.mxu0 0.0
    %87 = vmatpush1.msra.mxu0 %v56
    %88 = vmatprep.subr.mxu0 0.0
    %89 = vmatpush1.msra.mxu0 %v57
    %90 = vmatprep.subr.mxu0 0.0
    %91 = vmatpush1.msra.mxu0 %v58
    %92 = vmatprep.subr.mxu0 0.0
    %93 = vmatpush1.msra.mxu0 %v59
    %94 = vmatprep.subr.mxu0 0.0
    %95 = vmatpush1.msra.mxu0 %v60
    %96 = vmatprep.subr.mxu0 0.0
    %97 = vmatpush1.msra.mxu0 %v61
    %98 = vmatprep.subr.mxu0 0.0
    %99 = vmatpush1.msra.mxu0 %v62
    %100 = vmatprep.subr.mxu0 0.0
    %101 = vmatpush1.msra.mxu0 %v63
    %102 = vmatprep.subr.mxu0 0.0
    %103 = vmatpush1.msra.mxu0 %v64
    %104 = vmatprep.subr.mxu0 0.0
    %105 = vmatpush1.msra.mxu0 0.0
    %106 = vmatprep.subr.mxu0 0.0
    %107 = vmatpush1.msra.mxu0 0.0
    %108 = vmatprep.subr.mxu0 0.0
    %109 = vmatpush1.msra.mxu0 0.0
    %110 = vmatprep.subr.mxu0 0.0
    %111 = vmatpush1.msra.mxu0 0.0
    %112 = vmatprep.subr.mxu0 0.0
    %113 = vmatpush1.msra.mxu0 0.0
    %114 = vmatprep.subr.mxu0 0.0
    %115 = vmatpush1.msra.mxu0 0.0
    %116 = vmatprep.subr.mxu0 0.0
    %117 = vmatpush1.msra.mxu0 0.0
    %118 = vmatprep.subr.mxu0 0.0
    %119 = vmatpush1.msra.mxu0 0.0
    %120 = vmatprep.subr.mxu0 0.0
    %121 = vmatpush1.msra.mxu0 0.0
    %122 = vmatprep.subr.mxu0 0.0
    %123 = vmatpush1.msra.mxu0 0.0
    %124 = vmatprep.subr.mxu0 0.0
    %125 = vmatpush1.msra.mxu0 0.0
    %126 = vmatprep.subr.mxu0 0.0
    %127 = vmatpush1.msra.mxu0 0.0
    %128 = vmatprep.subr.mxu0 0.0
    %129 = vmatpush1.msra.mxu0 0.0
    %130 = vmatprep.subr.mxu0 0.0
    %131 = vmatpush1.msra.mxu0 0.0
    %132 = vmatprep.subr.mxu0 0.0
    %133 = vmatpush1.msra.mxu0 0.0
    %134 = vmatprep.subr.mxu0 0.0
    %135 = vmatpush1.msra.mxu0 0.0
    %136 = vmatprep.mubr.f32.mxu0 0.0
    %137 = vmatmul.mubr.f32.gmra.mrb[0].mxu0 %v47
    %v138 = vpop.f32.mrb[0].mxu0
    %v139 = vadd.f32 %v70, %v138
    %v140 = vpop.f32.mrb[0].mxu0
    %141 = vmatprep.mubr.f32.mxu0 0.0
    %142 = vmatmul.mubr.f32.gmra.mrb[0].mxu0 %v48
    %v143 = vpop.f32.mrb[0].mxu0
    %v144 = vadd.f32 %v70, %v143
    %v145 = vpop.f32.mrb[0].mxu0
    %146 = vdwg.mxu0
    %s147 = sld [smem:[#allocation2]]
    %vm148 = vcmp.gt.f32.partialorder %v139, 0.0
    %vm149 = vcmp.gt.f32.partialorder %v144, 0.0
    %v150 = vstv %s147
    %v151 = vmul.f32 %v150, %v139
    %v152 = vmul.f32 %v150, %v144
    %v153 = vsel %vm148, %v139, %v151
    %v154 = vsel %vm149, %v144, %v152
    %155 = vst [vmem:[#allocation8] sm:$0xff] %v153
    %156 = vst [vmem:[#allocation8 + $0x8] sm:$0xff] %v154
    // Predicated region
    $region26: #{tpu_custom_call.1} parent=1 // pred_check
      _
    $region27: #{tpu_custom_call.1} parent=1 // pred_check_branch
      %158 = sbr.rel (0) target = $region29
    $region28: #{tpu_custom_call.1} parent=1 // pred_region
      %s160 = ssub.s32 256, 256
      %161 = vsyncadd [#allocation5], %s160
      %s162 = sshll.u32 [#allocation8], 4
      %s163 = int_to_ptr.vmem [resolvable:$true] %s162
      %168 = dma.vmem_to_hbm [thread:$0]  %s163, 256, %s4, [#allocation5], 128, 128, 8
    $region29: #{tpu_custom_call.1} parent=1 // pred_fallthru
      _
    // Predicated region
    $region30: #{tpu_custom_call.1} parent=1 // pred_check
      _
    $region31: #{tpu_custom_call.1} parent=1 // pred_check_branch
      %170 = sbr.rel (0) target = $region33
    $region32: #{tpu_custom_call.1} parent=1 // pred_region
      %171 = dma.done [#allocation5], 256
    $region33: #{tpu_custom_call.1} parent=1 // pred_fallthru
      _
    %172 = vsyncpa [#allocation4], 1
    %173 = vsyncpa [#allocation7], 1
    %174 = vsyncpa [#allocation5], 1

</llo_original>
